<compile_context>
chip_gen: v5e
topology: v5e:2x2
jax: 0.10.0
libtpu: 0.0.40
codegen_flags: <defaults>
</compile_context>

<pallas_src>
import numpy as np
import jax
import jax.numpy as jnp
from jax import lax
from jax.experimental import pallas as pl
from jax.experimental.pallas import tpu as pltpu

N_QUBITS = 4          # 'ZZII' / 'IIZZ' readout hard-codes 4 qubits in the module
N_LAYERS = 2
DIM = 2 ** N_QUBITS   # 16


# ----------------------------- glue: circuit precompute (numpy, cached) -----------------------------

def _ry(t):
    c, s = np.cos(t / 2.0), np.sin(t / 2.0)
    return np.array([[c, -s], [s, c]], dtype=np.complex128)


def _rz(t):
    return np.array([[np.exp(-1j * t / 2.0), 0.0],
                     [0.0, np.exp(1j * t / 2.0)]], dtype=np.complex128)


def _kron_all(mats):
    out = mats[0]
    for m in mats[1:]:
        out = np.kron(out, m)
    return out


def _layer_unitary(params, n_qubits):
    """One variational layer: per-qubit RZ(p[2q+1]) @ RY(p[2q]), then CZ ring."""
    ops = [_rz(params[2 * q + 1]) @ _ry(params[2 * q]) for q in range(n_qubits)]
    # qubit 0 is the LSB of the statevector index -> kron(q_{n-1}, ..., q_0)
    single = _kron_all(list(reversed(ops)))
    d = 2 ** n_qubits
    diag = np.ones(d, dtype=np.complex128)
    for i in range(n_qubits):
        j = (i + 1) % n_qubits
        for b in range(d):
            if ((b >> i) & 1) and ((b >> j) & 1):
                diag[b] *= -1.0
    return np.diag(diag) @ single


def _full_layer_unitary(weights, n_qubits, n_layers):
    U = np.eye(2 ** n_qubits, dtype=np.complex128)
    for l in range(n_layers):
        Ul = _layer_unitary(weights[l * n_qubits * 2:(l + 1) * n_qubits * 2], n_qubits)
        U = Ul @ U
    return U


_PRECOMP_CACHE = {}  # weights bytes -> device array A (2D, D) float32


def _precompute_A(weights):
    """Fold encoding phase + observables into two quadratic forms, stacked to (2*D, D)."""
    w = np.asarray(weights, dtype=np.float64).reshape(-1)
    key = w.tobytes()
    cached = _PRECOMP_CACHE.get(key)
    if cached is not None:
        return cached

    U = _full_layer_unitary(w, N_QUBITS, N_LAYERS)                 # (D, D) complex
    idx = np.arange(DIM)
    pop = np.array([bin(k).count("1") for k in range(DIM)], dtype=np.int64)
    phase = (-1j) ** pop                                           # (-i)^popcount(k)
    V = U * phase[None, :]                                         # U @ diag(phase)
    Vr, Vi = V.real, V.imag

    def bit(q):
        return ((idx >> q) & 1).astype(np.float64)

    e0 = (-1.0) ** (bit(3) + bit(2))                               # 'ZZII' (Z on q3,q2)
    e1 = (-1.0) ** (bit(1) + bit(0))                               # 'IIZZ' (Z on q1,q0)
    A0 = Vr.T @ (e0[:, None] * Vr) + Vi.T @ (e0[:, None] * Vi)     # (D, D) real symmetric
    A1 = Vr.T @ (e1[:, None] * Vr) + Vi.T @ (e1[:, None] * Vi)
    A = jnp.asarray(np.vstack([A0, A1]).astype(np.float32))        # (2D, D)
    _PRECOMP_CACHE[key] = A
    return A


# ----------------------------------- Pallas kernel -----------------------------------------

def vqc_kernel(ang_ref, a_ref, out_ref):
    # ang_ref: (N_QUBITS, TB) angles, batch on the lane axis
    # a_ref  : (2*DIM, DIM)   stacked quadratic forms [A0; A1]
    # out_ref: (2, TB)        [<ZZII>; <IIZZ>] per batch column
    ang = ang_ref[...]                                  # (nq, TB) f32
    c = jnp.cos(0.5 * ang)
    s = jnp.sin(0.5 * ang)

    # product-state magnitudes m[k, b] = prod_q (cos if bit_q(k)==0 else sin)
    basis = lax.broadcasted_iota(jnp.int32, (DIM, 1), 0)            # (D, 1) basis-state index
    m = None
    for q in range(N_QUBITS):
        bit_q = ((basis >> q) & 1).astype(jnp.float32)              # (D, 1) static per q
        cq = c[q:q + 1, :]                                          # (1, TB)
        sq = s[q:q + 1, :]                                          # (1, TB)
        fac = cq + bit_q * (sq - cq)                                # (D, TB)
        m = fac if m is None else m * fac

    # expectations via quadratic forms:  out[o, b] = m[:, b]^T A_o m[:, b]
    y = jnp.dot(a_ref[...], m, preferred_element_type=jnp.float32)  # (2D, TB)
    out0 = jnp.sum(m * y[:DIM, :], axis=0, keepdims=True)           # (1, TB)
    out1 = jnp.sum(m * y[DIM:, :], axis=0, keepdims=True)           # (1, TB)
    out_ref[...] = jnp.concatenate([out0, out1], axis=0)            # (2, TB)


def vqc_forward(inputs, weights, *, tile_b=None):
    """inputs: (B, N_QUBITS) float32 angles; weights: (N_QUBITS*N_LAYERS*2,) float.
    Returns (B, 2) = [<ZZII>, <IIZZ>] per batch row."""
    inputs = jnp.asarray(inputs, jnp.float32)
    B = inputs.shape[0]
    A = _precompute_A(weights)                                      # cached per weights

    if tile_b is None:
        tile_b = 512 if B >= 512 else 128                           # lane-dense batch tiles
    Bp = -(-B // tile_b) * tile_b

    ang_t = inputs.T                                                # (nq, B), batch on lanes
    if Bp != B:
        ang_t = jnp.pad(ang_t, ((0, 0), (0, Bp - B)))               # zero-angle padding is harmless

    grid = (Bp // tile_b,)
    out = pl.pallas_call(
        vqc_kernel,
        out_shape=jax.ShapeDtypeStruct((2, Bp), jnp.float32),
        grid=grid,
        in_specs=[
            pl.BlockSpec((N_QUBITS, tile_b), lambda i: (0, i)),     # streamed angles
            pl.BlockSpec((2 * DIM, DIM), lambda i: (0, 0)),         # resident constant block
        ],
        out_specs=pl.BlockSpec((2, tile_b), lambda i: (0, i)),
        compiler_params=pltpu.CompilerParams(
            dimension_semantics=("parallel",),                      # shard batch tiles across TCs
            vmem_limit_bytes=32 * 1024 * 1024,
        ),
        cost_estimate=pl.CostEstimate(
            flops=Bp * (2 * (2 * DIM) * DIM + 10 * DIM),
            transcendentals=2 * N_QUBITS * Bp,
            bytes_accessed=4 * (N_QUBITS * Bp + 2 * Bp + 2 * DIM * DIM),
        ),
    )(ang_t, A)

    return out[:, :B].T                                             # (B, 2)


# --------------------------------- reference (plain numpy) ------------------------------------

def vqc_reference(inputs, weights):
    U = _full_layer_unitary(np.asarray(weights, dtype=np.float64), N_QUBITS, N_LAYERS)
    ang = np.asarray(inputs, dtype=np.float64)
    B = ang.shape[0]
    idx = np.arange(DIM)
    bits = np.stack([((idx >> q) & 1) for q in range(N_QUBITS)], axis=0).astype(np.float64)
    c, s = np.cos(ang / 2.0), np.sin(ang / 2.0)
    m = np.ones((B, DIM))
    for q in range(N_QUBITS):
        m = m * (c[:, q:q + 1] * (1.0 - bits[q][None, :]) + s[:, q:q + 1] * bits[q][None, :])
    phase = (-1j) ** bits.sum(axis=0)
    psi = m * phase[None, :]
    out = psi @ U.T
    prob = np.abs(out) ** 2
    e0 = (-1.0) ** (bits[3] + bits[2])
    e1 = (-1.0) ** (bits[1] + bits[0])
    eigs = np.stack([e0, e1], axis=1)
    return (prob @ eigs).astype(np.float32)


# -------------------------------------- main -------------------------------------------------

if __name__ == "__main__":
    key = jax.random.PRNGKey(0)
    k_in, k_in2, k_w = jax.random.split(key, 3)

    # Case 1: module default — batch=8, weights initialized to zeros (TorchConnector init).
    B = 8
    inputs = jax.random.uniform(k_in, (B, N_QUBITS), minval=-jnp.pi, maxval=jnp.pi,
                                dtype=jnp.float32)
    weights0 = np.zeros(N_QUBITS * N_LAYERS * 2, dtype=np.float32)
    out = jax.block_until_ready(vqc_forward(inputs, weights0))
    ref = vqc_reference(np.asarray(inputs), weights0)
    np.testing.assert_allclose(np.asarray(out), ref, atol=2e-5, rtol=1e-4)

    # Case 2: non-trivial weights and a batch that exercises multiple grid tiles + padding.
    B2 = 300
    inputs2 = jax.random.uniform(k_in2, (B2, N_QUBITS), minval=-jnp.pi, maxval=jnp.pi,
                                 dtype=jnp.float32)
    weights1 = np.asarray(
        jax.random.uniform(k_w, (N_QUBITS * N_LAYERS * 2,), minval=-jnp.pi, maxval=jnp.pi))
    out2 = jax.block_until_ready(vqc_forward(inputs2, weights1))
    ref2 = vqc_reference(np.asarray(inputs2), weights1)
    np.testing.assert_allclose(np.asarray(out2), ref2, atol=2e-5, rtol=1e-4)

    # TODO(synk): the config.ibmq shot-sampling branch (CircuitQNN + Decode_Layer) is not
    # modeled; this implements the default OpflowQNN/AerPauliExpectation exact-expectation path.
    print("KERNEL_OK")
</pallas_src>

<mosaic_0001>
module attributes {stable_mosaic.version = 11 : i64} {
  func.func @vqc_kernel(%arg0: i32, %arg1: memref<4x128xf32, #tpu.memory_space<vmem>>, %arg2: memref<32x16xf32, #tpu.memory_space<vmem>>, %arg3: memref<2x128xf32, #tpu.memory_space<vmem>>) attributes {dimension_semantics = [#tpu.dimension_semantics<parallel>], iteration_bounds = array<i64: 1>, scalar_prefetch = 0 : i64, scratch_operands = 0 : i64, tpu.core_type = #tpu.core_type<tc>, window_params = [{transform_indices = @transform_0, window_bounds = array<i64: 4, 128>}, {pipeline_mode = #tpu.pipeline_mode<synchronous>, transform_indices = @transform_1, window_bounds = array<i64: 32, 16>}, {transform_indices = @transform_2, window_bounds = array<i64: 2, 128>}]} {
    %c0 = arith.constant 0 : index
    %c0_0 = arith.constant 0 : index
    %0 = vector.load %arg1[%c0, %c0_0] : memref<4x128xf32, #tpu.memory_space<vmem>>, vector<4x128xf32>
    %cst = arith.constant 5.000000e-01 : f32
    %1 = vector.broadcast %cst : f32 to vector<4x128xf32>
    %2 = arith.mulf %1, %0 : vector<4x128xf32>
    %3 = math.cos %2 : vector<4x128xf32>
    %cst_1 = arith.constant 5.000000e-01 : f32
    %4 = vector.broadcast %cst_1 : f32 to vector<4x128xf32>
    %5 = arith.mulf %4, %0 : vector<4x128xf32>
    %6 = math.sin %5 : vector<4x128xf32>
    %7 = tpu.iota {dimensions = array<i32: 0>} : vector<16x1xi32>
    %c0_i32 = arith.constant 0 : i32
    %8 = vector.broadcast %c0_i32 : i32 to vector<16x1xi32>
    %9 = arith.shrsi %7, %8 : vector<16x1xi32>
    %c1_i32 = arith.constant 1 : i32
    %10 = vector.broadcast %c1_i32 : i32 to vector<16x1xi32>
    %11 = arith.andi %9, %10 : vector<16x1xi32>
    %12 = arith.sitofp %11 : vector<16x1xi32> to vector<16x1xf32>
    %13 = vector.extract_strided_slice %3 {offsets = [0, 0], sizes = [1, 128], strides = [1, 1]} : vector<4x128xf32> to vector<1x128xf32>
    %14 = vector.extract_strided_slice %6 {offsets = [0, 0], sizes = [1, 128], strides = [1, 1]} : vector<4x128xf32> to vector<1x128xf32>
    %15 = arith.subf %14, %13 : vector<1x128xf32>
    %16 = vector.broadcast %12 : vector<16x1xf32> to vector<16x128xf32>
    %17 = vector.broadcast %15 : vector<1x128xf32> to vector<16x128xf32>
    %18 = arith.mulf %16, %17 : vector<16x128xf32>
    %19 = vector.broadcast %13 : vector<1x128xf32> to vector<16x128xf32>
    %20 = arith.addf %19, %18 : vector<16x128xf32>
    %c1_i32_2 = arith.constant 1 : i32
    %21 = vector.broadcast %c1_i32_2 : i32 to vector<16x1xi32>
    %22 = arith.shrsi %7, %21 : vector<16x1xi32>
    %c1_i32_3 = arith.constant 1 : i32
    %23 = vector.broadcast %c1_i32_3 : i32 to vector<16x1xi32>
    %24 = arith.andi %22, %23 : vector<16x1xi32>
    %25 = arith.sitofp %24 : vector<16x1xi32> to vector<16x1xf32>
    %26 = vector.extract_strided_slice %3 {offsets = [1, 0], sizes = [1, 128], strides = [1, 1]} : vector<4x128xf32> to vector<1x128xf32>
    %27 = vector.extract_strided_slice %6 {offsets = [1, 0], sizes = [1, 128], strides = [1, 1]} : vector<4x128xf32> to vector<1x128xf32>
    %28 = arith.subf %27, %26 : vector<1x128xf32>
    %29 = vector.broadcast %25 : vector<16x1xf32> to vector<16x128xf32>
    %30 = vector.broadcast %28 : vector<1x128xf32> to vector<16x128xf32>
    %31 = arith.mulf %29, %30 : vector<16x128xf32>
    %32 = vector.broadcast %26 : vector<1x128xf32> to vector<16x128xf32>
    %33 = arith.addf %32, %31 : vector<16x128xf32>
    %34 = arith.mulf %20, %33 : vector<16x128xf32>
    %c2_i32 = arith.constant 2 : i32
    %35 = vector.broadcast %c2_i32 : i32 to vector<16x1xi32>
    %36 = arith.shrsi %7, %35 : vector<16x1xi32>
    %c1_i32_4 = arith.constant 1 : i32
    %37 = vector.broadcast %c1_i32_4 : i32 to vector<16x1xi32>
    %38 = arith.andi %36, %37 : vector<16x1xi32>
    %39 = arith.sitofp %38 : vector<16x1xi32> to vector<16x1xf32>
    %40 = vector.extract_strided_slice %3 {offsets = [2, 0], sizes = [1, 128], strides = [1, 1]} : vector<4x128xf32> to vector<1x128xf32>
    %41 = vector.extract_strided_slice %6 {offsets = [2, 0], sizes = [1, 128], strides = [1, 1]} : vector<4x128xf32> to vector<1x128xf32>
    %42 = arith.subf %41, %40 : vector<1x128xf32>
    %43 = vector.broadcast %39 : vector<16x1xf32> to vector<16x128xf32>
    %44 = vector.broadcast %42 : vector<1x128xf32> to vector<16x128xf32>
    %45 = arith.mulf %43, %44 : vector<16x128xf32>
    %46 = vector.broadcast %40 : vector<1x128xf32> to vector<16x128xf32>
    %47 = arith.addf %46, %45 : vector<16x128xf32>
    %48 = arith.mulf %34, %47 : vector<16x128xf32>
    %c3_i32 = arith.constant 3 : i32
    %49 = vector.broadcast %c3_i32 : i32 to vector<16x1xi32>
    %50 = arith.shrsi %7, %49 : vector<16x1xi32>
    %c1_i32_5 = arith.constant 1 : i32
    %51 = vector.broadcast %c1_i32_5 : i32 to vector<16x1xi32>
    %52 = arith.andi %50, %51 : vector<16x1xi32>
    %53 = arith.sitofp %52 : vector<16x1xi32> to vector<16x1xf32>
    %54 = vector.extract_strided_slice %3 {offsets = [3, 0], sizes = [1, 128], strides = [1, 1]} : vector<4x128xf32> to vector<1x128xf32>
    %55 = vector.extract_strided_slice %6 {offsets = [3, 0], sizes = [1, 128], strides = [1, 1]} : vector<4x128xf32> to vector<1x128xf32>
    %56 = arith.subf %55, %54 : vector<1x128xf32>
    %57 = vector.broadcast %53 : vector<16x1xf32> to vector<16x128xf32>
    %58 = vector.broadcast %56 : vector<1x128xf32> to vector<16x128xf32>
    %59 = arith.mulf %57, %58 : vector<16x128xf32>
    %60 = vector.broadcast %54 : vector<1x128xf32> to vector<16x128xf32>
    %61 = arith.addf %60, %59 : vector<16x128xf32>
    %62 = arith.mulf %48, %61 : vector<16x128xf32>
    %c0_6 = arith.constant 0 : index
    %c0_7 = arith.constant 0 : index
    %63 = vector.load %arg2[%c0_6, %c0_7] : memref<32x16xf32, #tpu.memory_space<vmem>>, vector<32x16xf32>
    %cst_8 = arith.constant dense<0.000000e+00> : vector<32x128xf32>
    %64 = tpu.matmul %63, %62, %cst_8 {dimension_numbers = #tpu.dot_dimension_numbers<[1], [0], [0], [1], [0, 0, 1, 1], [], []>} : vector<32x16xf32>, vector<16x128xf32>, vector<32x128xf32> -> vector<32x128xf32>
    %65 = vector.extract_strided_slice %64 {offsets = [0, 0], sizes = [16, 128], strides = [1, 1]} : vector<32x128xf32> to vector<16x128xf32>
    %66 = arith.mulf %62, %65 : vector<16x128xf32>
    %cst_9 = arith.constant dense<0.000000e+00> : vector<128xf32>
    %67 = vector.multi_reduction <add>, %66, %cst_9 [0] : vector<16x128xf32> to vector<128xf32>
    %68 = vector.shape_cast %67 : vector<128xf32> to vector<1x128xf32>
    %69 = vector.extract_strided_slice %64 {offsets = [16, 0], sizes = [16, 128], strides = [1, 1]} : vector<32x128xf32> to vector<16x128xf32>
    %70 = arith.mulf %62, %69 : vector<16x128xf32>
    %cst_10 = arith.constant dense<0.000000e+00> : vector<128xf32>
    %71 = vector.multi_reduction <add>, %70, %cst_10 [0] : vector<16x128xf32> to vector<128xf32>
    %72 = vector.shape_cast %71 : vector<128xf32> to vector<1x128xf32>
    %73 = tpu.concatenate %68, %72 in 0 : vector<1x128xf32>, vector<1x128xf32> -> vector<2x128xf32>
    %c0_11 = arith.constant 0 : index
    %c0_12 = arith.constant 0 : index
    %74 = vector.load %arg3[%c0_11, %c0_12] : memref<2x128xf32, #tpu.memory_space<vmem>>, vector<2x128xf32>
    tpu.vector_store %arg3[%c0_11, %c0_12], %73 {strides = array<i32>} : memref<2x128xf32, #tpu.memory_space<vmem>>, vector<2x128xf32>,
    return
  }
  func.func @transform_0(%arg0: i32) -> (i32, i32) {
    %c0_i32 = arith.constant 0 : i32
    %c0_i32_0 = arith.constant 0 : i32
    return %c0_i32, %arg0 : i32, i32
  }
  func.func @transform_1(%arg0: i32) -> (i32, i32) {
    %c0_i32 = arith.constant 0 : i32
    %c0_i32_0 = arith.constant 0 : i32
    %c0_i32_1 = arith.constant 0 : i32
    return %c0_i32, %c0_i32_0 : i32, i32
  }
  func.func @transform_2(%arg0: i32) -> (i32, i32) {
    %c0_i32 = arith.constant 0 : i32
    %c0_i32_0 = arith.constant 0 : i32
    return %c0_i32, %arg0 : i32, i32
  }
}

</mosaic_0001>

<llo_original>
// kernel: tpu_custom_call.1
$region0: #{tpu_custom_call.1}
  #allocation0 [shape = 'u32[]', space=smem, size = 0x4, offset = 0x4, fixed_abs, tag = 'smem constant byte address 0x4 - core index']
  #allocation1 [shape = 'u32[72,128]{1,0:T(1,128)}', space=vmem, size = 0x9000, scoped, tag = 'internal scratch']
  %s0 = inlined_call_operand.vmem [shape: f32[4,128], index: 0, kind: input, shape index: {}]
  %s1 = inlined_call_operand.vmem [shape: f32[32,16], index: 1, kind: input, shape index: {}]
  %s2 = inlined_call_operand.hbm [shape: f32[2,128], index: 2, kind: output, shape index: {}]
  %s3 = sld [smem:[#allocation0]]
  $region18: #{tpu_custom_call.1} parent=0
    _
  %s5 = ssub.s32 1, %s3
  %s6 = scalar_select 0, %s5, %s3
  $region1: #{tpu_custom_call.1} parent=0
    #allocation2 [shape = 'u8[1024]{0}', space=vmem, size = 0x400, scoped, tag = 'output window, operand 0, single buffered']
    #allocation3 [shape = 's32[1]{0}', space=sflag, size = 0x4, scoped, tag = 'scoped memory for tpu_custom_call.1']
    %7 = vsyncpa [#allocation3], 0
    // Predicated region
    $region2: #{tpu_custom_call.1} parent=1 // pred_check
      _
    $region3: #{tpu_custom_call.1} parent=1 // pred_check_branch
      %9 = sbr.rel (0) target = $region5
    $region4: #{tpu_custom_call.1} parent=1 // pred_region
      _
    $region5: #{tpu_custom_call.1} parent=1 // pred_fallthru
      _
    // Predicated region
    $region6: #{tpu_custom_call.1} parent=1 // pred_check
      _
    $region7: #{tpu_custom_call.1} parent=1 // pred_check_branch
      %11 = sbr.rel (0) target = $region9
    $region8: #{tpu_custom_call.1} parent=1 // pred_region
      _
    $region9: #{tpu_custom_call.1} parent=1 // pred_fallthru
      _
    %v12 = vld [vmem:[%s0] sm:$0xf]
    %v13 = vmul.f32 %v12, 0.5
    %v14 = vand.u32 2147483647, %v13
    %vm15 = vcmp.le.f32.partialorder %v14, 0.7853982
    %vm16 = vcmp.lt.s32.totalorder %v13, 0
    %v17 = vand.u32 %v13, 2139095040
    %v18 = vshrl.u32 %v17, 23
    %v19 = vsub.s32 %v18, 127
    %v20 = vand.u32 2147483647, %v13
    %v21 = vand.u32 %v20, 8388607
    %v22 = vor.u32 %v21, 8388608
    %v23 = vsub.s32 0, %v22
    %v24 = vadd.s32 %v19, 1
    %vm25 = vcmp.gt.s32.totalorder %v24, 0
    %v26 = vsel %vm25, %v24, 0
    %v27 = vshrl.u32 %v26, 5
    %v28 = vand.u32 %v26, 31
    %v29 = vsub.s32 32, %v28
    %v30 = vshrl.u32 683565275, %v29
    %v31 = vshll.u32 683565275, %v28
    %v32 = vshrl.u32 2475754826, %v29
    %v33 = vor.u32 %v31, %v32
    %v34 = vshll.u32 2475754826, %v28
    %v35 = vshrl.u32 2131351028, %v29
    %v36 = vor.u32 %v34, %v35
    %v37 = vshll.u32 2131351028, %v28
    %v38 = vshrl.u32 2102212464, %v29
    %v39 = vor.u32 %v37, %v38
    %v40 = vshll.u32 2102212464, %v28
    %v41 = vshrl.u32 920167782, %v29
    %v42 = vor.u32 %v40, %v41
    %v43 = vshll.u32 920167782, %v28
    %v44 = vshrl.u32 1326507024, %v29
    %v45 = vor.u32 %v43, %v44
    %vm46 = vcmp.lt.s32.totalorder %v27, 1
    %vm47 = vcmp.lt.s32.totalorder %v27, 2
    %vm48 = vcmp.lt.s32.totalorder %v27, 3
    %vm49 = vcmp.lt.s32.totalorder %v27, 4
    %v50 = vsel %vm46, %v30, %v33
    %v51 = vsel %vm49, %v39, 2102212464
    %v52 = vsel %vm48, %v36, %v51
    %v53 = vsel %vm47, %v50, %v52
    %v54 = vsel %vm46, %v33, %v36
    %v55 = vsel %vm49, %v42, 920167782
    %v56 = vsel %vm48, %v39, %v55
    %v57 = vsel %vm47, %v54, %v56
    %v58 = vsel %vm46, %v36, %v39
    %v59 = vsel %vm49, %v45, 1326507024
    %v60 = vsel %vm48, %v42, %v59
    %v61 = vsel %vm47, %v58, %v60
    %v62 = vshll.u32 %v22, 8
    %v63 = vand.u32 %v62, 65535
    %v64 = vshrl.u32 %v62, 16
    %v65 = vand.u32 %v61, 65535
    %v66 = vshrl.u32 %v61, 16
    %v67 = vmul.u32 %v63, %v65
    %v68 = vmul.u32 %v63, %v66
    %v69 = vmul.u32 %v64, %v65
    %v70 = vmul.u32 %v64, %v66
    %v71 = vshll.u32 %v68, 16
    %v72 = vshrl.u32 %v68, 16
    %v73 = vshll.u32 %v69, 16
    %v74 = vshrl.u32 %v69, 16
    %vm75 = vc.u32 %v67, %v71
    %v76 = vsel %vm75, 1, 0
    %v77 = vadd.s32 %v67, %v71
    %v78 = vadd.s32 %v70, %v76
    %vm79 = vc.u32 %v77, %v73
    %v80 = vsel %vm79, 1, 0
    %v81 = vadd.s32 %v77, %v73
    %v82 = vadd.s32 %v78, %v80
    %v83 = vadd.s32 %v82, %v72
    %v84 = vadd.s32 %v83, %v74
    %v85 = vand.u32 %v62, 65535
    %v86 = vshrl.u32 %v62, 16
    %v87 = vand.u32 %v57, 65535
    %v88 = vshrl.u32 %v57, 16
    %v89 = vmul.u32 %v85, %v87
    %v90 = vmul.u32 %v85, %v88
    %v91 = vmul.u32 %v86, %v87
    %v92 = vmul.u32 %v86, %v88
    %v93 = vshll.u32 %v90, 16
    %v94 = vshrl.u32 %v90, 16
    %v95 = vshll.u32 %v91, 16
    %v96 = vshrl.u32 %v91, 16
    %vm97 = vc.u32 %v89, %v93
    %v98 = vsel %vm97, 1, 0
    %v99 = vadd.s32 %v89, %v93
    %v100 = vadd.s32 %v92, %v98
    %vm101 = vc.u32 %v99, %v95
    %v102 = vsel %vm101, 1, 0
    %v103 = vadd.s32 %v99, %v95
    %v104 = vadd.s32 %v100, %v102
    %v105 = vadd.s32 %v104, %v94
    %v106 = vadd.s32 %v105, %v96
    %v107 = vmul.u32 %v62, %v53
    %v108 = vadd.s32 %v84, %v103
    %vm109 = vc.u32 %v84, %v103
    %v110 = vadd.s32 %v106, 1
    %v111 = vsel %vm109, %v110, %v106
    %v112 = vadd.s32 %v107, %v111
    %v113 = vadd.s32 %v112, 536870912
    %v114 = vshrl.u32 %v113, 30
    %v115 = vshll.u32 %v114, 30
    %v116 = vsub.s32 %v112, %v115
    %vm117 = vcmp.lt.s32.totalorder %v116, 0
    %v118 = vsub.s32 0, %v116
    %v119 = vsel %vm117, %v118, %v116
    %v120 = vclz %v119
    %v121 = vsub.s32 %v120, 2
    %vm122 = vcmp.gt.s32.totalorder 0, %v121
    %v123 = vsel %vm122, 0, %v121
    %v124 = vsub.s32 32, %v123
    %v125 = vshll.u32 %v116, %v123
    %v126 = vshrl.u32 %v108, %v124
    %v127 = vor.u32 %v125, %v126
    %v128 = vsub.s32 4294967266, %v123
    %v129 = vadd.s32 %v128, 127
    %v130 = vshll.u32 %v129, 23
    %v131 = vor.u32 4788187, %v130
    %v132 = vand.u32 2147483647, %v131
    %v134 = vcvt.s32.f32 %v127
    %v135 = vmul.f32 %v134, %v132
    %v136 = vxor.u32 %v135, 2147483648
    %v137 = vsel %vm16, %v136, %v135
    %v138 = vsub.s32 4, %v114
    %v139 = vsel %vm16, %v138, %v114
    %v140 = vsel %vm15, %v13, %v137
    %v141 = vsel %vm15, 0, %v139
    %v142 = vmul.f32 %v140, %v140
    %v143 = vmul.f32 %v142, -0.001358992
    %v144 = vadd.f32 %v143, 0.041655596
    %v145 = vmul.f32 %v142, %v144
    %v146 = vadd.f32 %v145, -0.4999988
    %v147 = vmul.f32 %v142, %v146
    %v148 = vadd.f32 1.0, %v147
    %v149 = vmul.f32 %v140, %v140
    %v150 = vmul.f32 %v149, -0.00019511016
    %v151 = vadd.f32 %v150, 0.008332121
    %v152 = vmul.f32 %v149, %v151
    %v153 = vadd.f32 %v152, -0.16666654
    %v154 = vmul.f32 %v149, %v153
    %v155 = vadd.f32 %v154, 1.0
    %v156 = vmul.f32 %v155, %v140
    %vm157 = vweird.f32 %v13
    %v158 = vand.u32 %v141, 3
    %vm159 = vcmp.lt.s32.totalorder %v158, 2
    %vm160 = vcmp.eq.s32.totalorder %v158, 0
    %v161 = vxor.u32 %v156, 2147483648
    %v162 = vsel %vm160, %v148, %v161
    %vm163 = vcmp.eq.s32.totalorder %v158, 2
    %v164 = vxor.u32 %v148, 2147483648
    %v165 = vsel %vm163, %v164, %v156
    %v166 = vsel %vm159, %v162, %v165
    %v167 = vsel %vm157, nan, %v166
    %v168 = vand.u32 2147483647, %v13
    %vm169 = vcmp.le.f32.partialorder %v168, 0.7853982
    %vm170 = vcmp.lt.s32.totalorder %v13, 0
    %v171 = vand.u32 %v13, 2139095040
    %v172 = vshrl.u32 %v171, 23
    %v173 = vsub.s32 %v172, 127
    %v174 = vand.u32 2147483647, %v13
    %v175 = vand.u32 %v174, 8388607
    %v176 = vor.u32 %v175, 8388608
    %v177 = vsub.s32 0, %v176
    %v178 = vadd.s32 %v173, 1
    %vm179 = vcmp.gt.s32.totalorder %v178, 0
    %v180 = vsel %vm179, %v178, 0
    %v181 = vshrl.u32 %v180, 5
    %v182 = vand.u32 %v180, 31
    %v183 = vsub.s32 32, %v182
    %v184 = vshrl.u32 683565275, %v183
    %v185 = vshll.u32 683565275, %v182
    %v186 = vshrl.u32 2475754826, %v183
    %v187 = vor.u32 %v185, %v186
    %v188 = vshll.u32 2475754826, %v182
    %v189 = vshrl.u32 2131351028, %v183
    %v190 = vor.u32 %v188, %v189
    %v191 = vshll.u32 2131351028, %v182
    %v192 = vshrl.u32 2102212464, %v183
    %v193 = vor.u32 %v191, %v192
    %v194 = vshll.u32 2102212464, %v182
    %v195 = vshrl.u32 920167782, %v183
    %v196 = vor.u32 %v194, %v195
    %v197 = vshll.u32 920167782, %v182
    %v198 = vshrl.u32 1326507024, %v183
    %v199 = vor.u32 %v197, %v198
    %vm200 = vcmp.lt.s32.totalorder %v181, 1
    %vm201 = vcmp.lt.s32.totalorder %v181, 2
    %vm202 = vcmp.lt.s32.totalorder %v181, 3
    %vm203 = vcmp.lt.s32.totalorder %v181, 4
    %v204 = vsel %vm200, %v184, %v187
    %v205 = vsel %vm203, %v193, 2102212464
    %v206 = vsel %vm202, %v190, %v205
    %v207 = vsel %vm201, %v204, %v206
    %v208 = vsel %vm200, %v187, %v190
    %v209 = vsel %vm203, %v196, 920167782
    %v210 = vsel %vm202, %v193, %v209
    %v211 = vsel %vm201, %v208, %v210
    %v212 = vsel %vm200, %v190, %v193
    %v213 = vsel %vm203, %v199, 1326507024
    %v214 = vsel %vm202, %v196, %v213
    %v215 = vsel %vm201, %v212, %v214
    %v216 = vshll.u32 %v176, 8
    %v217 = vand.u32 %v216, 65535
    %v218 = vshrl.u32 %v216, 16
    %v219 = vand.u32 %v215, 65535
    %v220 = vshrl.u32 %v215, 16
    %v221 = vmul.u32 %v217, %v219
    %v222 = vmul.u32 %v217, %v220
    %v223 = vmul.u32 %v218, %v219
    %v224 = vmul.u32 %v218, %v220
    %v225 = vshll.u32 %v222, 16
    %v226 = vshrl.u32 %v222, 16
    %v227 = vshll.u32 %v223, 16
    %v228 = vshrl.u32 %v223, 16
    %vm229 = vc.u32 %v221, %v225
    %v230 = vsel %vm229, 1, 0
    %v231 = vadd.s32 %v221, %v225
    %v232 = vadd.s32 %v224, %v230
    %vm233 = vc.u32 %v231, %v227
    %v234 = vsel %vm233, 1, 0
    %v235 = vadd.s32 %v231, %v227
    %v236 = vadd.s32 %v232, %v234
    %v237 = vadd.s32 %v236, %v226
    %v238 = vadd.s32 %v237, %v228
    %v239 = vand.u32 %v216, 65535
    %v240 = vshrl.u32 %v216, 16
    %v241 = vand.u32 %v211, 65535
    %v242 = vshrl.u32 %v211, 16
    %v243 = vmul.u32 %v239, %v241
    %v244 = vmul.u32 %v239, %v242
    %v245 = vmul.u32 %v240, %v241
    %v246 = vmul.u32 %v240, %v242
    %v247 = vshll.u32 %v244, 16
    %v248 = vshrl.u32 %v244, 16
    %v249 = vshll.u32 %v245, 16
    %v250 = vshrl.u32 %v245, 16
    %vm251 = vc.u32 %v243, %v247
    %v252 = vsel %vm251, 1, 0
    %v253 = vadd.s32 %v243, %v247
    %v254 = vadd.s32 %v246, %v252
    %vm255 = vc.u32 %v253, %v249
    %v256 = vsel %vm255, 1, 0
    %v257 = vadd.s32 %v253, %v249
    %v258 = vadd.s32 %v254, %v256
    %v259 = vadd.s32 %v258, %v248
    %v260 = vadd.s32 %v259, %v250
    %v261 = vmul.u32 %v216, %v207
    %v262 = vadd.s32 %v238, %v257
    %vm263 = vc.u32 %v238, %v257
    %v264 = vadd.s32 %v260, 1
    %v265 = vsel %vm263, %v264, %v260
    %v266 = vadd.s32 %v261, %v265
    %v267 = vadd.s32 %v266, 536870912
    %v268 = vshrl.u32 %v267, 30
    %v269 = vshll.u32 %v268, 30
    %v270 = vsub.s32 %v266, %v269
    %vm271 = vcmp.lt.s32.totalorder %v270, 0
    %v272 = vsub.s32 0, %v270
    %v273 = vsel %vm271, %v272, %v270
    %v274 = vclz %v273
    %v275 = vsub.s32 %v274, 2
    %vm276 = vcmp.gt.s32.totalorder 0, %v275
    %v277 = vsel %vm276, 0, %v275
    %v278 = vsub.s32 32, %v277
    %v279 = vshll.u32 %v270, %v277
    %v280 = vshrl.u32 %v262, %v278
    %v281 = vor.u32 %v279, %v280
    %v282 = vsub.s32 4294967266, %v277
    %v283 = vadd.s32 %v282, 127
    %v284 = vshll.u32 %v283, 23
    %v285 = vor.u32 4788187, %v284
    %v286 = vand.u32 2147483647, %v285
    %v288 = vcvt.s32.f32 %v281
    %v289 = vmul.f32 %v288, %v286
    %v290 = vxor.u32 %v289, 2147483648
    %v291 = vsel %vm170, %v290, %v289
    %v292 = vsub.s32 4, %v268
    %v293 = vsel %vm170, %v292, %v268
    %v294 = vsel %vm169, %v13, %v291
    %v295 = vsel %vm169, 0, %v293
    %v296 = vmul.f32 %v294, %v294
    %v297 = vmul.f32 %v296, -0.001358992
    %v298 = vadd.f32 %v297, 0.041655596
    %v299 = vmul.f32 %v296, %v298
    %v300 = vadd.f32 %v299, -0.4999988
    %v301 = vmul.f32 %v296, %v300
    %v302 = vadd.f32 1.0, %v301
    %v303 = vmul.f32 %v294, %v294
    %v304 = vmul.f32 %v303, -0.00019511016
    %v305 = vadd.f32 %v304, 0.008332121
    %v306 = vmul.f32 %v303, %v305
    %v307 = vadd.f32 %v306, -0.16666654
    %v308 = vmul.f32 %v303, %v307
    %v309 = vadd.f32 %v308, 1.0
    %v310 = vmul.f32 %v309, %v294
    %vm311 = vweird.f32 %v13
    %v312 = vadd.s32 %v295, 3
    %v313 = vand.u32 %v312, 3
    %vm314 = vcmp.lt.s32.totalorder %v313, 2
    %vm315 = vcmp.eq.s32.totalorder %v313, 0
    %v316 = vxor.u32 %v310, 2147483648
    %v317 = vsel %vm315, %v302, %v316
    %vm318 = vcmp.eq.s32.totalorder %v313, 2
    %v319 = vxor.u32 %v302, 2147483648
    %v320 = vsel %vm318, %v319, %v310
    %v321 = vsel %vm314, %v317, %v320
    %v322 = vsel %vm311, nan, %v321
    %v323 = vlaneseq
    %v324 = vshrl.u32 %v323, 7
    %v325 = vadd.s32 %v324, 8
    %v326 = vand.u32 %v324, 1
    %v327 = vand.u32 %v325, 1
    %v328 = vcvt.s32.f32 %v326
    %v329 = vcvt.s32.f32 %v327
    %v330 = vsub.f32 %v322, %v167
    %v331 = vperm.slane %v330, 0
    %v332 = vmul.f32 %v328, %v331
    %v333 = vmul.f32 %v329, %v331
    %v334 = vperm.slane %v167, 0
    %v335 = vadd.f32 %v334, %v332
    %v336 = vadd.f32 %v334, %v333
    %v337 = vshra.s32 %v324, 1
    %v338 = vshra.s32 %v325, 1
    %v339 = vand.u32 %v337, 1
    %v340 = vand.u32 %v338, 1
    %v341 = vcvt.s32.f32 %v339
    %v342 = vcvt.s32.f32 %v340
    %v343 = vperm.slane %v330, 1
    %v344 = vmul.f32 %v341, %v343
    %v345 = vmul.f32 %v342, %v343
    %v346 = vperm.slane %v167, 1
    %v347 = vadd.f32 %v346, %v344
    %v348 = vadd.f32 %v346, %v345
    %v349 = vmul.f32 %v335, %v347
    %v350 = vmul.f32 %v336, %v348
    %v351 = vshra.s32 %v324, 2
    %v352 = vshra.s32 %v325, 2
    %v353 = vand.u32 %v351, 1
    %v354 = vand.u32 %v352, 1
    %v355 = vcvt.s32.f32 %v353
    %v356 = vcvt.s32.f32 %v354
    %v357 = vperm.slane %v330, 2
    %v358 = vmul.f32 %v355, %v357
    %v359 = vmul.f32 %v356, %v357
    %v360 = vperm.slane %v167, 2
    %v361 = vadd.f32 %v360, %v358
    %v362 = vadd.f32 %v360, %v359
    %v363 = vmul.f32 %v349, %v361
    %v364 = vmul.f32 %v350, %v362
    %v365 = vshra.s32 %v324, 3
    %v366 = vshra.s32 %v325, 3
    %v367 = vand.u32 %v365, 1
    %v368 = vand.u32 %v366, 1
    %v369 = vcvt.s32.f32 %v367
    %v370 = vcvt.s32.f32 %v368
    %v371 = vperm.slane %v330, 3
    %v372 = vmul.f32 %v369, %v371
    %v373 = vmul.f32 %v370, %v371
    %v374 = vperm.slane %v167, 3
    %v375 = vadd.f32 %v374, %v372
    %v376 = vadd.f32 %v374, %v373
    %v377 = vmul.f32 %v363, %v375
    %v378 = vmul.f32 %v364, %v376
    %v379 = vld [vmem:[%s1] sm:$0xff]
    %v380 = vld [vmem:[%s1 + $0x8] sm:$0xff]
    %v381 = vld [vmem:[%s1 + $0x10] sm:$0xff]
    %v382 = vld [vmem:[%s1 + $0x18] sm:$0xff]
    %vm383 = vcmask 130048
    %v385 = vsel %vm383, %v379, 0
    %v388 = vsel %vm383, %v380, 0
    %v391 = vsel %vm383, %v381, 0
    %v394 = vsel %vm383, %v382, 0
    %396 = vmatpush.msra.mxu0 0.0
    %397 = vmatpush.msra.mxu0 0.0
    %398 = vmatpush.msra.mxu0 0.0
    %399 = vmatpush.msra.mxu0 0.0
    %400 = vmatpush.msra.mxu0 0.0
    %401 = vmatpush.msra.mxu0 0.0
    %402 = vmatpush.msra.mxu0 0.0
    %403 = vmatpush.msra.mxu0 0.0
    %404 = vmatpush.msra.mxu0 0.0
    %405 = vmatpush.msra.mxu0 0.0
    %406 = vmatpush.msra.mxu0 0.0
    %407 = vmatpush.msra.mxu0 0.0
    %408 = vmatpush.msra.mxu0 0.0
    %409 = vmatpush.msra.mxu0 0.0
    %410 = vmatpush.msra.mxu0 %v378
    %411 = vmatpush.msra.mxu0 %v377
    %412 = vmatmul.f32.gmra.mxu0 %v385
    %v413 = vpop.f32.mrf.mxu0
    %v414 = vadd.f32 0.0, %v413
    %415 = vmatmul.f32.gmra.mxu0 %v388
    %v416 = vpop.f32.mrf.mxu0
    %v417 = vadd.f32 0.0, %v416
    %418 = vmatmul.f32.gmra.mxu0 %v391
    %v419 = vpop.f32.mrf.mxu0
    %v420 = vadd.f32 0.0, %v419
    %421 = vmatmul.f32.gmra.mxu0 %v394
    %v422 = vpop.f32.mrf.mxu0
    %v423 = vadd.f32 0.0, %v422
    %424 = vdwg.mxu0
    %v425 = vmul.f32 %v377, %v414
    %v426 = vmul.f32 %v378, %v417
    %v427 = vadd.f32 %v425, %v426
    %v428 = vrot.slane %v427, 4
    %v429 = vadd.f32 %v427, %v428
    %v430 = vrot.slane %v429, 2
    %v431 = vadd.f32 %v429, %v430
    %v432 = vrot.slane %v431, 1
    %v433 = vadd.f32 %v431, %v432
    %v434 = vmul.f32 %v377, %v420
    %v435 = vmul.f32 %v378, %v423
    %v436 = vadd.f32 %v434, %v435
    %v437 = vrot.slane %v436, 4
    %v438 = vadd.f32 %v436, %v437
    %v439 = vrot.slane %v438, 2
    %v440 = vadd.f32 %v438, %v439
    %v441 = vrot.slane %v440, 1
    %v442 = vadd.f32 %v440, %v441
    %vm443 = vcmask 1040384
    %v444 = vsel %vm443, %v433, %v442
    %445 = vst [vmem:[#allocation2] sm:$0x3] %v444
    // Predicated region
    $region10: #{tpu_custom_call.1} parent=1 // pred_check
      _
    $region11: #{tpu_custom_call.1} parent=1 // pred_check_branch
      %447 = sbr.rel (0) target = $region13
    $region12: #{tpu_custom_call.1} parent=1 // pred_region
      %449 = vsyncadd [#allocation3], 0
      %s451 = sshll.u32 [#allocation2], 4
      %s452 = int_to_ptr.vmem [resolvable:$true] %s451
      %s453 = sshll.u32 %s2, 4
      %s454 = int_to_ptr.hbm [resolvable:$true] %s453
      %456 = dma.vmem_to_hbm [thread:$0]  %s452, 32, %s454, [#allocation3]
    $region13: #{tpu_custom_call.1} parent=1 // pred_fallthru
      _
    // Predicated region
    $region14: #{tpu_custom_call.1} parent=1 // pred_check
      _
    $region15: #{tpu_custom_call.1} parent=1 // pred_check_branch
      %458 = sbr.rel (0) target = $region17
    $region16: #{tpu_custom_call.1} parent=1 // pred_region
      %460 = dma.done [#allocation3], 32
    $region17: #{tpu_custom_call.1} parent=1 // pred_fallthru
      _
    %461 = vsyncpa [#allocation3], 1

</llo_original>
